<compile_context>
chip_gen: v6e
topology: v6e:2x2x1
jax: 0.10.0
libtpu: 0.0.40
codegen_flags: <defaults>
</compile_context>

<pallas_src>
import jax
import jax.numpy as jnp
from jax.experimental import pallas as pl
from jax.experimental.pallas import tpu as pltpu

INPUT_DIM = 784
HIDDEN_DIMS = [256, 128]
OUTPUT_DIM = 10

_LANE = 128
_SUBLANE = 8
K_PAD = ((INPUT_DIM + _LANE - 1) // _LANE) * _LANE   # 784 -> 896
N_PAD = _LANE                                        # 10  -> 128


def _round_up(n: int, m: int) -> int:
    return ((n + m - 1) // m) * m


def _mlp_kernel(x_ref, w1_ref, b1_ref, w2_ref, b2_ref, w3_ref, b3_ref, o_ref):
    """Fused MLP forward on one batch tile.

    Weights are bf16 (MXU-native), accumulation is f32, bias-add/ReLU in f32.
    """
    x = x_ref[...]                                                # (bm, K_PAD) f32

    # Layer 0: Linear(896 -> 256) + ReLU
    h1 = jnp.dot(x.astype(jnp.bfloat16), w1_ref[...],
                 preferred_element_type=jnp.float32)
    h1 = jnp.maximum(h1 + b1_ref[...], 0.0)

    # Layer 1: Linear(256 -> 128) + ReLU
    h2 = jnp.dot(h1.astype(jnp.bfloat16), w2_ref[...],
                 preferred_element_type=jnp.float32)
    h2 = jnp.maximum(h2 + b2_ref[...], 0.0)

    # Output layer: Linear(128 -> 128 padded), no activation
    out = jnp.dot(h2.astype(jnp.bfloat16), w3_ref[...],
                  preferred_element_type=jnp.float32)
    o_ref[...] = (out + b3_ref[...]).astype(o_ref.dtype)


def dynamic_neural_network_forward(x, params):
    """x: (B, ...) flattened to (B, 784). params: dict of f32 weights/biases."""
    batch = x.shape[0]
    x2d = x.reshape(batch, -1).astype(jnp.float32)
    assert x2d.shape[1] == INPUT_DIM

    # --- lane-dense padding of K (784 -> 896) and output N (10 -> 128) ---
    x2d = jnp.pad(x2d, ((0, 0), (0, K_PAD - INPUT_DIM)))
    w1 = jnp.pad(params["w1"], ((0, K_PAD - INPUT_DIM), (0, 0))).astype(jnp.bfloat16)
    b1 = params["b1"].astype(jnp.float32)
    w2 = params["w2"].astype(jnp.bfloat16)
    b2 = params["b2"].astype(jnp.float32)
    w3 = jnp.pad(params["w3"], ((0, 0), (0, N_PAD - OUTPUT_DIM))).astype(jnp.bfloat16)
    b3 = jnp.pad(params["b3"], ((0, 0), (0, N_PAD - OUTPUT_DIM))).astype(jnp.float32)

    # --- batch tiling: big batches get 256-row M tiles (fills MXU, shards on
    #     v7x megacore); tiny batches run as one sublane-padded tile. ---
    if batch >= 256:
        bm = 256
    elif batch >= 128:
        bm = 128
    else:
        bm = _round_up(batch, _SUBLANE)
    b_pad = _round_up(batch, bm)
    if b_pad != batch:
        x2d = jnp.pad(x2d, ((0, b_pad - batch), (0, 0)))
    grid = (b_pad // bm,)

    in_specs = [
        pl.BlockSpec((bm, K_PAD), lambda i: (i, 0)),      # activations: tiled on batch
        pl.BlockSpec(w1.shape, lambda i: (0, 0)),         # weights: resident across grid
        pl.BlockSpec(b1.shape, lambda i: (0, 0)),
        pl.BlockSpec(w2.shape, lambda i: (0, 0)),
        pl.BlockSpec(b2.shape, lambda i: (0, 0)),
        pl.BlockSpec(w3.shape, lambda i: (0, 0)),
        pl.BlockSpec(b3.shape, lambda i: (0, 0)),
    ]
    out_specs = pl.BlockSpec((bm, N_PAD), lambda i: (i, 0))

    flops = 2 * b_pad * (K_PAD * HIDDEN_DIMS[0]
                         + HIDDEN_DIMS[0] * HIDDEN_DIMS[1]
                         + HIDDEN_DIMS[1] * N_PAD)
    bytes_accessed = (x2d.size * 4
                      + w1.size * 2 + w2.size * 2 + w3.size * 2
                      + b1.size * 4 + b2.size * 4 + b3.size * 4
                      + b_pad * N_PAD * 4)
    cost = pl.CostEstimate(flops=flops, transcendentals=0,
                           bytes_accessed=bytes_accessed)

    out = pl.pallas_call(
        _mlp_kernel,
        out_shape=jax.ShapeDtypeStruct((b_pad, N_PAD), jnp.float32),
        grid=grid,
        in_specs=in_specs,
        out_specs=out_specs,
        compiler_params=pltpu.CompilerParams(
            dimension_semantics=("parallel",)),
        cost_estimate=cost,
    )(x2d, w1, b1, w2, b2, w3, b3)

    # Strip batch / lane padding.
    return out[:batch, :OUTPUT_DIM]


def init_params(key):
    """Deterministic init mirroring torch.nn.Linear default (U[-1/sqrt(fan_in), ...])."""
    dims = [INPUT_DIM] + HIDDEN_DIMS + [OUTPUT_DIM]
    params = {}
    keys = jax.random.split(key, 2 * (len(dims) - 1))
    for i, (d_in, d_out) in enumerate(zip(dims[:-1], dims[1:])):
        bound = 1.0 / (d_in ** 0.5)
        w = jax.random.uniform(keys[2 * i], (d_in, d_out), jnp.float32, -bound, bound)
        b = jax.random.uniform(keys[2 * i + 1], (1, d_out), jnp.float32, -bound, bound)
        params[f"w{i + 1}"] = w
        params[f"b{i + 1}"] = b
    return params


def reference_forward(x, params):
    """Plain-JAX reference using the same bf16-weight / f32-accumulate math."""
    h = x.reshape(x.shape[0], -1).astype(jnp.float32)
    w1 = params["w1"].astype(jnp.bfloat16)
    w2 = params["w2"].astype(jnp.bfloat16)
    w3 = params["w3"].astype(jnp.bfloat16)
    h1 = jnp.maximum(
        jnp.dot(h.astype(jnp.bfloat16), w1, preferred_element_type=jnp.float32)
        + params["b1"], 0.0)
    h2 = jnp.maximum(
        jnp.dot(h1.astype(jnp.bfloat16), w2, preferred_element_type=jnp.float32)
        + params["b2"], 0.0)
    return (jnp.dot(h2.astype(jnp.bfloat16), w3, preferred_element_type=jnp.float32)
            + params["b3"])


if __name__ == "__main__":
    key = jax.random.PRNGKey(0)
    k_param, k_x = jax.random.split(key)

    params = init_params(k_param)
    # Image-like input (B, C, H, W) = (8, 1, 28, 28) -> flattened to (8, 784) in wrapper.
    x = jax.random.normal(k_x, (8, 1, 28, 28), dtype=jnp.float32)

    out = dynamic_neural_network_forward(x, params)
    out = jax.block_until_ready(out)

    ref = reference_forward(x, params)
    assert out.shape == (8, OUTPUT_DIM), out.shape
    assert jnp.allclose(out, ref, atol=2e-3, rtol=2e-3), float(jnp.max(jnp.abs(out - ref)))

    print("KERNEL_OK")
</pallas_src>

<mosaic_0001>
module attributes {stable_mosaic.version = 11 : i64} {
  func.func @_mlp_kernel(%arg0: i32, %arg1: memref<8x896xf32, #tpu.memory_space<vmem>>, %arg2: memref<896x256xbf16, #tpu.memory_space<vmem>>, %arg3: memref<1x256xf32, #tpu.memory_space<vmem>>, %arg4: memref<256x128xbf16, #tpu.memory_space<vmem>>, %arg5: memref<1x128xf32, #tpu.memory_space<vmem>>, %arg6: memref<128x128xbf16, #tpu.memory_space<vmem>>, %arg7: memref<1x128xf32, #tpu.memory_space<vmem>>, %arg8: memref<8x128xf32, #tpu.memory_space<vmem>>) attributes {dimension_semantics = [#tpu.dimension_semantics<parallel>], iteration_bounds = array<i64: 1>, scalar_prefetch = 0 : i64, scratch_operands = 0 : i64, tpu.core_type = #tpu.core_type<tc>, window_params = [{transform_indices = @transform_0, window_bounds = array<i64: 8, 896>}, {pipeline_mode = #tpu.pipeline_mode<synchronous>, transform_indices = @transform_1, window_bounds = array<i64: 896, 256>}, {pipeline_mode = #tpu.pipeline_mode<synchronous>, transform_indices = @transform_2, window_bounds = array<i64: 1, 256>}, {pipeline_mode = #tpu.pipeline_mode<synchronous>, transform_indices = @transform_3, window_bounds = array<i64: 256, 128>}, {pipeline_mode = #tpu.pipeline_mode<synchronous>, transform_indices = @transform_4, window_bounds = array<i64: 1, 128>}, {pipeline_mode = #tpu.pipeline_mode<synchronous>, transform_indices = @transform_5, window_bounds = array<i64: 128, 128>}, {pipeline_mode = #tpu.pipeline_mode<synchronous>, transform_indices = @transform_6, window_bounds = array<i64: 1, 128>}, {transform_indices = @transform_7, window_bounds = array<i64: 8, 128>}]} {
    %c0 = arith.constant 0 : index
    %c0_0 = arith.constant 0 : index
    %0 = vector.load %arg1[%c0, %c0_0] : memref<8x896xf32, #tpu.memory_space<vmem>>, vector<8x896xf32>
    %1 = arith.truncf %0 : vector<8x896xf32> to vector<8x896xbf16>
    %c0_1 = arith.constant 0 : index
    %c0_2 = arith.constant 0 : index
    %2 = vector.load %arg2[%c0_1, %c0_2] : memref<896x256xbf16, #tpu.memory_space<vmem>>, vector<896x256xbf16>
    %cst = arith.constant dense<0.000000e+00> : vector<8x256xf32>
    %3 = tpu.matmul %1, %2, %cst {dimension_numbers = #tpu.dot_dimension_numbers<[1], [0], [0], [1], [0, 0, 1, 1], [], []>} : vector<8x896xbf16>, vector<896x256xbf16>, vector<8x256xf32> -> vector<8x256xf32>
    %c0_3 = arith.constant 0 : index
    %c0_4 = arith.constant 0 : index
    %4 = vector.load %arg3[%c0_3, %c0_4] : memref<1x256xf32, #tpu.memory_space<vmem>>, vector<1x256xf32>
    %5 = vector.broadcast %4 : vector<1x256xf32> to vector<8x256xf32>
    %6 = arith.addf %3, %5 : vector<8x256xf32>
    %cst_5 = arith.constant 0.000000e+00 : f32
    %7 = vector.broadcast %cst_5 : f32 to vector<8x256xf32>
    %8 = arith.maximumf %6, %7 : vector<8x256xf32>
    %9 = arith.truncf %8 : vector<8x256xf32> to vector<8x256xbf16>
    %c0_6 = arith.constant 0 : index
    %c0_7 = arith.constant 0 : index
    %10 = vector.load %arg4[%c0_6, %c0_7] : memref<256x128xbf16, #tpu.memory_space<vmem>>, vector<256x128xbf16>
    %cst_8 = arith.constant dense<0.000000e+00> : vector<8x128xf32>
    %11 = tpu.matmul %9, %10, %cst_8 {dimension_numbers = #tpu.dot_dimension_numbers<[1], [0], [0], [1], [0, 0, 1, 1], [], []>} : vector<8x256xbf16>, vector<256x128xbf16>, vector<8x128xf32> -> vector<8x128xf32>
    %c0_9 = arith.constant 0 : index
    %c0_10 = arith.constant 0 : index
    %12 = vector.load %arg5[%c0_9, %c0_10] : memref<1x128xf32, #tpu.memory_space<vmem>>, vector<1x128xf32>
    %13 = vector.broadcast %12 : vector<1x128xf32> to vector<8x128xf32>
    %14 = arith.addf %11, %13 : vector<8x128xf32>
    %cst_11 = arith.constant 0.000000e+00 : f32
    %15 = vector.broadcast %cst_11 : f32 to vector<8x128xf32>
    %16 = arith.maximumf %14, %15 : vector<8x128xf32>
    %17 = arith.truncf %16 : vector<8x128xf32> to vector<8x128xbf16>
    %c0_12 = arith.constant 0 : index
    %c0_13 = arith.constant 0 : index
    %18 = vector.load %arg6[%c0_12, %c0_13] : memref<128x128xbf16, #tpu.memory_space<vmem>>, vector<128x128xbf16>
    %cst_14 = arith.constant dense<0.000000e+00> : vector<8x128xf32>
    %19 = tpu.matmul %17, %18, %cst_14 {dimension_numbers = #tpu.dot_dimension_numbers<[1], [0], [0], [1], [0, 0, 1, 1], [], []>} : vector<8x128xbf16>, vector<128x128xbf16>, vector<8x128xf32> -> vector<8x128xf32>
    %c0_15 = arith.constant 0 : index
    %c0_16 = arith.constant 0 : index
    %20 = vector.load %arg7[%c0_15, %c0_16] : memref<1x128xf32, #tpu.memory_space<vmem>>, vector<1x128xf32>
    %21 = vector.broadcast %20 : vector<1x128xf32> to vector<8x128xf32>
    %22 = arith.addf %19, %21 : vector<8x128xf32>
    %c0_17 = arith.constant 0 : index
    %c0_18 = arith.constant 0 : index
    %23 = vector.load %arg8[%c0_17, %c0_18] : memref<8x128xf32, #tpu.memory_space<vmem>>, vector<8x128xf32>
    tpu.vector_store %arg8[%c0_17, %c0_18], %22 {strides = array<i32>} : memref<8x128xf32, #tpu.memory_space<vmem>>, vector<8x128xf32>,
    return
  }
  func.func @transform_0(%arg0: i32) -> (i32, i32) {
    %c0_i32 = arith.constant 0 : i32
    %c0_i32_0 = arith.constant 0 : i32
    return %arg0, %c0_i32 : i32, i32
  }
  func.func @transform_1(%arg0: i32) -> (i32, i32) {
    %c0_i32 = arith.constant 0 : i32
    %c0_i32_0 = arith.constant 0 : i32
    %c0_i32_1 = arith.constant 0 : i32
    return %c0_i32, %c0_i32_0 : i32, i32
  }
  func.func @transform_2(%arg0: i32) -> (i32, i32) {
    %c0_i32 = arith.constant 0 : i32
    %c0_i32_0 = arith.constant 0 : i32
    %c0_i32_1 = arith.constant 0 : i32
    return %c0_i32, %c0_i32_0 : i32, i32
  }
  func.func @transform_3(%arg0: i32) -> (i32, i32) {
    %c0_i32 = arith.constant 0 : i32
    %c0_i32_0 = arith.constant 0 : i32
    %c0_i32_1 = arith.constant 0 : i32
    return %c0_i32, %c0_i32_0 : i32, i32
  }
  func.func @transform_4(%arg0: i32) -> (i32, i32) {
    %c0_i32 = arith.constant 0 : i32
    %c0_i32_0 = arith.constant 0 : i32
    %c0_i32_1 = arith.constant 0 : i32
    return %c0_i32, %c0_i32_0 : i32, i32
  }
  func.func @transform_5(%arg0: i32) -> (i32, i32) {
    %c0_i32 = arith.constant 0 : i32
    %c0_i32_0 = arith.constant 0 : i32
    %c0_i32_1 = arith.constant 0 : i32
    return %c0_i32, %c0_i32_0 : i32, i32
  }
  func.func @transform_6(%arg0: i32) -> (i32, i32) {
    %c0_i32 = arith.constant 0 : i32
    %c0_i32_0 = arith.constant 0 : i32
    %c0_i32_1 = arith.constant 0 : i32
    return %c0_i32, %c0_i32_0 : i32, i32
  }
  func.func @transform_7(%arg0: i32) -> (i32, i32) {
    %c0_i32 = arith.constant 0 : i32
    %c0_i32_0 = arith.constant 0 : i32
    return %arg0, %c0_i32 : i32, i32
  }
}

</mosaic_0001>

<llo_original>
// kernel: tpu_custom_call.1
$region0: #{tpu_custom_call.1}
  #allocation0 [shape = 'u32[]', space=smem, size = 0x4, offset = 0x4, fixed_abs, tag = 'smem constant byte address 0x4 - core index']
  #allocation1 [shape = 'u32[144,128]{1,0:T(1,128)}', space=vmem, size = 0x12000, scoped, tag = 'internal scratch']
  %s0 = inlined_call_operand.hbm [shape: f32[8,896], index: 0, kind: input, shape index: {}]
  %s1 = inlined_call_operand.hbm [shape: bf16[896,256], index: 1, kind: input, shape index: {}]
  %s2 = inlined_call_operand.vmem [shape: f32[1,256], index: 2, kind: input, shape index: {}]
  %s3 = inlined_call_operand.hbm [shape: bf16[256,128], index: 3, kind: input, shape index: {}]
  %s4 = inlined_call_operand.vmem [shape: f32[1,128], index: 4, kind: input, shape index: {}]
  %s5 = inlined_call_operand.hbm [shape: bf16[128,128], index: 5, kind: input, shape index: {}]
  %s6 = inlined_call_operand.vmem [shape: f32[1,128], index: 6, kind: input, shape index: {}]
  %s7 = inlined_call_operand.hbm [shape: f32[8,128], index: 7, kind: output, shape index: {}]
  %s8 = sld [smem:[#allocation0]]
  $region54: #{tpu_custom_call.1} parent=0
    _
  %s10 = ssub.s32 1, %s8
  %s11 = scalar_select 0, %s10, %s8
  $region1: #{tpu_custom_call.1} parent=0
    #allocation2 [shape = 'u8[28672]{0}', space=vmem, size = 0x7000, scoped, tag = 'input window, operand 0, single buffered']
    #allocation3 [shape = 's32[1]{0}', space=sflag, size = 0x4, scoped, tag = 'scoped memory for tpu_custom_call.1']
    #allocation4 [shape = 's32[1]{0}', space=sflag, size = 0x4, scoped, tag = 'scoped memory for tpu_custom_call.1']
    #allocation5 [shape = 'u8[458752]{0}', space=vmem, size = 0x70000, scoped, tag = 'input window, operand 1, single buffered']
    #allocation6 [shape = 's32[1]{0}', space=sflag, size = 0x4, scoped, tag = 'scoped memory for tpu_custom_call.1']
    #allocation7 [shape = 'u8[65536]{0}', space=vmem, size = 0x10000, scoped, tag = 'input window, operand 3, single buffered']
    #allocation8 [shape = 'u8[32768]{0}', space=vmem, size = 0x8000, scoped, tag = 'input window, operand 5, single buffered']
    #allocation9 [shape = 's32[1]{0}', space=sflag, size = 0x4, scoped, tag = 'scoped memory for tpu_custom_call.1']
    #allocation10 [shape = 'u8[4096]{0}', space=vmem, size = 0x1000, scoped, tag = 'output window, operand 0, single buffered']
    %12 = vsyncpa [#allocation3], 0
    %13 = vsyncpa [#allocation6], 0
    %14 = vsyncpa [#allocation9], 0
    %15 = vsyncpa [#allocation4], 0
    // Predicated region
    $region2: #{tpu_custom_call.1} parent=1 // pred_check
      _
    $region3: #{tpu_custom_call.1} parent=1 // pred_check_branch
      %17 = sbr.rel (0) target = $region5
    $region4: #{tpu_custom_call.1} parent=1 // pred_region
      %s19 = ssub.s32 896, 896
      %20 = vsyncadd [#allocation3], %s19
      %s22 = sshll.u32 [#allocation2], 4
      %s23 = int_to_ptr.vmem [resolvable:$true] %s22
      %25 = dma.hbm_to_vmem [thread:$0]  %s0, 896, %s23, [#allocation3]
    $region5: #{tpu_custom_call.1} parent=1 // pred_fallthru
      _
    // Predicated region
    $region6: #{tpu_custom_call.1} parent=1 // pred_check
      _
    $region7: #{tpu_custom_call.1} parent=1 // pred_check_branch
      %27 = sbr.rel (0) target = $region9
    $region8: #{tpu_custom_call.1} parent=1 // pred_region
      %s29 = ssub.s32 14336, 14336
      %30 = vsyncadd [#allocation6], %s29
      %s31 = sshll.u32 [#allocation5], 4
      %s32 = int_to_ptr.vmem [resolvable:$true] %s31
      %37 = dma.hbm_to_vmem [thread:$0]  %s1, 14336, %s32, [#allocation6], 128, 128, 8
    $region9: #{tpu_custom_call.1} parent=1 // pred_fallthru
      _
    // Predicated region
    $region10: #{tpu_custom_call.1} parent=1 // pred_check
      _
    $region11: #{tpu_custom_call.1} parent=1 // pred_check_branch
      %39 = sbr.rel (0) target = $region13
    $region12: #{tpu_custom_call.1} parent=1 // pred_region
      _
    $region13: #{tpu_custom_call.1} parent=1 // pred_fallthru
      _
    // Predicated region
    $region14: #{tpu_custom_call.1} parent=1 // pred_check
      _
    $region15: #{tpu_custom_call.1} parent=1 // pred_check_branch
      %41 = sbr.rel (0) target = $region17
    $region16: #{tpu_custom_call.1} parent=1 // pred_region
      %s43 = ssub.s32 2048, 2048
      %44 = vsyncadd [#allocation6], %s43
      %s45 = sshll.u32 [#allocation7], 4
      %s46 = int_to_ptr.vmem [resolvable:$true] %s45
      %51 = dma.hbm_to_vmem [thread:$0]  %s3, 2048, %s46, [#allocation6], 64, 64, 4
    $region17: #{tpu_custom_call.1} parent=1 // pred_fallthru
      _
    // Predicated region
    $region18: #{tpu_custom_call.1} parent=1 // pred_check
      _
    $region19: #{tpu_custom_call.1} parent=1 // pred_check_branch
      %53 = sbr.rel (0) target = $region21
    $region20: #{tpu_custom_call.1} parent=1 // pred_region
      _
    $region21: #{tpu_custom_call.1} parent=1 // pred_fallthru
      _
    // Predicated region
    $region22: #{tpu_custom_call.1} parent=1 // pred_check
      _
    $region23: #{tpu_custom_call.1} parent=1 // pred_check_branch
      %55 = sbr.rel (0) target = $region25
    $region24: #{tpu_custom_call.1} parent=1 // pred_region
      %s57 = ssub.s32 1024, 1024
      %58 = vsyncadd [#allocation9], %s57
      %s59 = sshll.u32 [#allocation8], 4
      %s60 = int_to_ptr.vmem [resolvable:$true] %s59
      %65 = dma.hbm_to_vmem [thread:$0]  %s5, 1024, %s60, [#allocation9], 64, 64, 4
    $region25: #{tpu_custom_call.1} parent=1 // pred_fallthru
      _
    // Predicated region
    $region26: #{tpu_custom_call.1} parent=1 // pred_check
      _
    $region27: #{tpu_custom_call.1} parent=1 // pred_check_branch
      %67 = sbr.rel (0) target = $region29
    $region28: #{tpu_custom_call.1} parent=1 // pred_region
      _
    $region29: #{tpu_custom_call.1} parent=1 // pred_fallthru
      _
    // Predicated region
    $region30: #{tpu_custom_call.1} parent=1 // pred_check
      _
    $region31: #{tpu_custom_call.1} parent=1 // pred_check_branch
      %69 = sbr.rel (0) target = $region33
    $region32: #{tpu_custom_call.1} parent=1 // pred_region
      %70 = dma.done [#allocation3], 896
    $region33: #{tpu_custom_call.1} parent=1 // pred_fallthru
      _
    // Predicated region
    $region34: #{tpu_custom_call.1} parent=1 // pred_check
      _
    $region35: #{tpu_custom_call.1} parent=1 // pred_check_branch
      %72 = sbr.rel (0) target = $region37
    $region36: #{tpu_custom_call.1} parent=1 // pred_region
      %73 = dma.done [#allocation6], 14336
    $region37: #{tpu_custom_call.1} parent=1 // pred_fallthru
      _
    // Predicated region
    $region38: #{tpu_custom_call.1} parent=1 // pred_check
      _
    $region39: #{tpu_custom_call.1} parent=1 // pred_check_branch
      %75 = sbr.rel (0) target = $region41
    $region40: #{tpu_custom_call.1} parent=1 // pred_region
      %76 = dma.done [#allocation6], 2048
    $region41: #{tpu_custom_call.1} parent=1 // pred_fallthru
      _
    // Predicated region
    $region42: #{tpu_custom_call.1} parent=1 // pred_check
      _
    $region43: #{tpu_custom_call.1} parent=1 // pred_check_branch
      %78 = sbr.rel (0) target = $region45
    $region44: #{tpu_custom_call.1} parent=1 // pred_region
      %79 = dma.done [#allocation9], 1024
    $region45: #{tpu_custom_call.1} parent=1 // pred_fallthru
      _
    %v81 = vld [vmem:[#allocation2] sm:$0xff]
    %v82 = vld [vmem:[#allocation2 + $0x8] sm:$0xff]
    %v83 = vld [vmem:[#allocation2 + $0x10] sm:$0xff]
    %v84 = vld [vmem:[#allocation2 + $0x18] sm:$0xff]
    %v85 = vld [vmem:[#allocation2 + $0x20] sm:$0xff]
    %v86 = vld [vmem:[#allocation2 + $0x28] sm:$0xff]
    %v87 = vld [vmem:[#allocation2 + $0x30] sm:$0xff]
    %v88 = vpack.c.bf16 %v81, %v81
    %v89 = vpack.c.bf16 %v82, %v82
    %v90 = vpack.c.bf16 %v83, %v83
    %v91 = vpack.c.bf16 %v84, %v84
    %v92 = vpack.c.bf16 %v85, %v85
    %v93 = vpack.c.bf16 %v86, %v86
    %v94 = vpack.c.bf16 %v87, %v87
    %v95 = vld [vmem:[#allocation5] sm:$0xff]
    %v96 = vld [vmem:[#allocation5 + $0x8] sm:$0xff]
    %v97 = vld [vmem:[#allocation5 + $0x10] sm:$0xff]
    %v98 = vld [vmem:[#allocation5 + $0x18] sm:$0xff]
    %v99 = vld [vmem:[#allocation5 + $0x20] sm:$0xff]
    %v100 = vld [vmem:[#allocation5 + $0x28] sm:$0xff]
    %v101 = vld [vmem:[#allocation5 + $0x30] sm:$0xff]
    %v102 = vld [vmem:[#allocation5 + $0x38] sm:$0xff]
    %v103 = vld [vmem:[#allocation5 + $0x40] sm:$0xff]
    %v104 = vld [vmem:[#allocation5 + $0x48] sm:$0xff]
    %v105 = vld [vmem:[#allocation5 + $0x50] sm:$0xff]
    %v106 = vld [vmem:[#allocation5 + $0x58] sm:$0xff]
    %v107 = vld [vmem:[#allocation5 + $0x60] sm:$0xff]
    %v108 = vld [vmem:[#allocation5 + $0x68] sm:$0xff]
    %v109 = vld [vmem:[#allocation5 + $0x70] sm:$0xff]
    %v110 = vld [vmem:[#allocation5 + $0x78] sm:$0xff]
    %v111 = vld [vmem:[#allocation5 + $0x80] sm:$0xff]
    %v112 = vld [vmem:[#allocation5 + $0x88] sm:$0xff]
    %v113 = vld [vmem:[#allocation5 + $0x90] sm:$0xff]
    %v114 = vld [vmem:[#allocation5 + $0x98] sm:$0xff]
    %v115 = vld [vmem:[#allocation5 + $0xa0] sm:$0xff]
    %v116 = vld [vmem:[#allocation5 + $0xa8] sm:$0xff]
    %v117 = vld [vmem:[#allocation5 + $0xb0] sm:$0xff]
    %v118 = vld [vmem:[#allocation5 + $0xb8] sm:$0xff]
    %v119 = vld [vmem:[#allocation5 + $0xc0] sm:$0xff]
    %v120 = vld [vmem:[#allocation5 + $0xc8] sm:$0xff]
    %v121 = vld [vmem:[#allocation5 + $0xd0] sm:$0xff]
    %v122 = vld [vmem:[#allocation5 + $0xd8] sm:$0xff]
    %v123 = vld [vmem:[#allocation5 + $0xe0] sm:$0xff]
    %v124 = vld [vmem:[#allocation5 + $0xe8] sm:$0xff]
    %v125 = vld [vmem:[#allocation5 + $0xf0] sm:$0xff]
    %v126 = vld [vmem:[#allocation5 + $0xf8] sm:$0xff]
    %v127 = vld [vmem:[#allocation5 + $0x100] sm:$0xff]
    %v128 = vld [vmem:[#allocation5 + $0x108] sm:$0xff]
    %v129 = vld [vmem:[#allocation5 + $0x110] sm:$0xff]
    %v130 = vld [vmem:[#allocation5 + $0x118] sm:$0xff]
    %v131 = vld [vmem:[#allocation5 + $0x120] sm:$0xff]
    %v132 = vld [vmem:[#allocation5 + $0x128] sm:$0xff]
    %v133 = vld [vmem:[#allocation5 + $0x130] sm:$0xff]
    %v134 = vld [vmem:[#allocation5 + $0x138] sm:$0xff]
    %v135 = vld [vmem:[#allocation5 + $0x140] sm:$0xff]
    %v136 = vld [vmem:[#allocation5 + $0x148] sm:$0xff]
    %v137 = vld [vmem:[#allocation5 + $0x150] sm:$0xff]
    %v138 = vld [vmem:[#allocation5 + $0x158] sm:$0xff]
    %v139 = vld [vmem:[#allocation5 + $0x160] sm:$0xff]
    %v140 = vld [vmem:[#allocation5 + $0x168] sm:$0xff]
    %v141 = vld [vmem:[#allocation5 + $0x170] sm:$0xff]
    %v142 = vld [vmem:[#allocation5 + $0x178] sm:$0xff]
    %v143 = vld [vmem:[#allocation5 + $0x180] sm:$0xff]
    %v144 = vld [vmem:[#allocation5 + $0x188] sm:$0xff]
    %v145 = vld [vmem:[#allocation5 + $0x190] sm:$0xff]
    %v146 = vld [vmem:[#allocation5 + $0x198] sm:$0xff]
    %v147 = vld [vmem:[#allocation5 + $0x1a0] sm:$0xff]
    %v148 = vld [vmem:[#allocation5 + $0x1a8] sm:$0xff]
    %v149 = vld [vmem:[#allocation5 + $0x1b0] sm:$0xff]
    %v150 = vld [vmem:[#allocation5 + $0x1b8] sm:$0xff]
    %v151 = vld [vmem:[#allocation5 + $0x1c0] sm:$0xff]
    %v152 = vld [vmem:[#allocation5 + $0x1c8] sm:$0xff]
    %v153 = vld [vmem:[#allocation5 + $0x1d0] sm:$0xff]
    %v154 = vld [vmem:[#allocation5 + $0x1d8] sm:$0xff]
    %v155 = vld [vmem:[#allocation5 + $0x1e0] sm:$0xff]
    %v156 = vld [vmem:[#allocation5 + $0x1e8] sm:$0xff]
    %v157 = vld [vmem:[#allocation5 + $0x1f0] sm:$0xff]
    %v158 = vld [vmem:[#allocation5 + $0x1f8] sm:$0xff]
    %v159 = vld [vmem:[#allocation5 + $0x200] sm:$0xff]
    %v160 = vld [vmem:[#allocation5 + $0x208] sm:$0xff]
    %v161 = vld [vmem:[#allocation5 + $0x210] sm:$0xff]
    %v162 = vld [vmem:[#allocation5 + $0x218] sm:$0xff]
    %v163 = vld [vmem:[#allocation5 + $0x220] sm:$0xff]
    %v164 = vld [vmem:[#allocation5 + $0x228] sm:$0xff]
    %v165 = vld [vmem:[#allocation5 + $0x230] sm:$0xff]
    %v166 = vld [vmem:[#allocation5 + $0x238] sm:$0xff]
    %v167 = vld [vmem:[#allocation5 + $0x240] sm:$0xff]
    %v168 = vld [vmem:[#allocation5 + $0x248] sm:$0xff]
    %v169 = vld [vmem:[#allocation5 + $0x250] sm:$0xff]
    %v170 = vld [vmem:[#allocation5 + $0x258] sm:$0xff]
    %v171 = vld [vmem:[#allocation5 + $0x260] sm:$0xff]
    %v172 = vld [vmem:[#allocation5 + $0x268] sm:$0xff]
    %v173 = vld [vmem:[#allocation5 + $0x270] sm:$0xff]
    %v174 = vld [vmem:[#allocation5 + $0x278] sm:$0xff]
    %v175 = vld [vmem:[#allocation5 + $0x280] sm:$0xff]
    %v176 = vld [vmem:[#allocation5 + $0x288] sm:$0xff]
    %v177 = vld [vmem:[#allocation5 + $0x290] sm:$0xff]
    %v178 = vld [vmem:[#allocation5 + $0x298] sm:$0xff]
    %v179 = vld [vmem:[#allocation5 + $0x2a0] sm:$0xff]
    %v180 = vld [vmem:[#allocation5 + $0x2a8] sm:$0xff]
    %v181 = vld [vmem:[#allocation5 + $0x2b0] sm:$0xff]
    %v182 = vld [vmem:[#allocation5 + $0x2b8] sm:$0xff]
    %v183 = vld [vmem:[#allocation5 + $0x2c0] sm:$0xff]
    %v184 = vld [vmem:[#allocation5 + $0x2c8] sm:$0xff]
    %v185 = vld [vmem:[#allocation5 + $0x2d0] sm:$0xff]
    %v186 = vld [vmem:[#allocation5 + $0x2d8] sm:$0xff]
    %v187 = vld [vmem:[#allocation5 + $0x2e0] sm:$0xff]
    %v188 = vld [vmem:[#allocation5 + $0x2e8] sm:$0xff]
    %v189 = vld [vmem:[#allocation5 + $0x2f0] sm:$0xff]
    %v190 = vld [vmem:[#allocation5 + $0x2f8] sm:$0xff]
    %v191 = vld [vmem:[#allocation5 + $0x300] sm:$0xff]
    %v192 = vld [vmem:[#allocation5 + $0x308] sm:$0xff]
    %v193 = vld [vmem:[#allocation5 + $0x310] sm:$0xff]
    %v194 = vld [vmem:[#allocation5 + $0x318] sm:$0xff]
    %v195 = vld [vmem:[#allocation5 + $0x320] sm:$0xff]
    %v196 = vld [vmem:[#allocation5 + $0x328] sm:$0xff]
    %v197 = vld [vmem:[#allocation5 + $0x330] sm:$0xff]
    %v198 = vld [vmem:[#allocation5 + $0x338] sm:$0xff]
    %v199 = vld [vmem:[#allocation5 + $0x340] sm:$0xff]
    %v200 = vld [vmem:[#allocation5 + $0x348] sm:$0xff]
    %v201 = vld [vmem:[#allocation5 + $0x350] sm:$0xff]
    %v202 = vld [vmem:[#allocation5 + $0x358] sm:$0xff]
    %v203 = vld [vmem:[#allocation5 + $0x360] sm:$0xff]
    %v204 = vld [vmem:[#allocation5 + $0x368] sm:$0xff]
    %v205 = vld [vmem:[#allocation5 + $0x370] sm:$0xff]
    %v206 = vld [vmem:[#allocation5 + $0x378] sm:$0xff]
    %v207 = vld [vmem:[%s2] sm:$0x3]
    %v209 = vlaneseq
    %v210 = vshrl.u32 %v209, 7
    %v211 = vsub.s32 0, %v210
    %v212 = vrot.slane %v207, %v211
    %v213 = vlaneseq
    %v214 = vshrl.u32 %v213, 7
    %v215 = vsub.s32 1, %v214
    %v216 = vrot.slane %v207, %v215
    %v331 = vunpack.c.l.b16 %v95
    %v332 = vunpack.c.h.b16 %v95
    %v333 = vunpack.c.l.b16 %v96
    %v334 = vunpack.c.h.b16 %v96
    %v335 = vunpack.c.l.b16 %v97
    %v336 = vunpack.c.h.b16 %v97
    %v337 = vunpack.c.l.b16 %v98
    %v338 = vunpack.c.h.b16 %v98
    %v339 = vunpack.c.l.b16 %v99
    %v340 = vunpack.c.h.b16 %v99
    %v341 = vunpack.c.l.b16 %v100
    %v342 = vunpack.c.h.b16 %v100
    %v343 = vunpack.c.l.b16 %v101
    %v344 = vunpack.c.h.b16 %v101
    %v345 = vunpack.c.l.b16 %v102
    %v346 = vunpack.c.h.b16 %v102
    %v347 = vunpack.c.l.b16 %v103
    %v348 = vunpack.c.h.b16 %v103
    %v349 = vunpack.c.l.b16 %v104
    %v350 = vunpack.c.h.b16 %v104
    %v351 = vunpack.c.l.b16 %v105
    %v352 = vunpack.c.h.b16 %v105
    %v353 = vunpack.c.l.b16 %v106
    %v354 = vunpack.c.h.b16 %v106
    %v355 = vunpack.c.l.b16 %v107
    %v356 = vunpack.c.h.b16 %v107
    %v357 = vunpack.c.l.b16 %v108
    %v358 = vunpack.c.h.b16 %v108
    %v359 = vunpack.c.l.b16 %v109
    %v360 = vunpack.c.h.b16 %v109
    %v361 = vunpack.c.l.b16 %v110
    %v362 = vunpack.c.h.b16 %v110
    %v363 = vunpack.c.l.b16 %v111
    %v364 = vunpack.c.h.b16 %v111
    %v365 = vunpack.c.l.b16 %v112
    %v366 = vunpack.c.h.b16 %v112
    %v367 = vunpack.c.l.b16 %v113
    %v368 = vunpack.c.h.b16 %v113
    %v369 = vunpack.c.l.b16 %v114
    %v370 = vunpack.c.h.b16 %v114
    %v371 = vunpack.c.l.b16 %v115
    %v372 = vunpack.c.h.b16 %v115
    %v373 = vunpack.c.l.b16 %v116
    %v374 = vunpack.c.h.b16 %v116
    %v375 = vunpack.c.l.b16 %v117
    %v376 = vunpack.c.h.b16 %v117
    %v377 = vunpack.c.l.b16 %v118
    %v378 = vunpack.c.h.b16 %v118
    %v379 = vunpack.c.l.b16 %v119
    %v380 = vunpack.c.h.b16 %v119
    %v381 = vunpack.c.l.b16 %v120
    %v382 = vunpack.c.h.b16 %v120
    %v383 = vunpack.c.l.b16 %v121
    %v384 = vunpack.c.h.b16 %v121
    %v385 = vunpack.c.l.b16 %v122
    %v386 = vunpack.c.h.b16 %v122
    %v387 = vunpack.c.l.b16 %v123
    %v388 = vunpack.c.h.b16 %v123
    %v389 = vunpack.c.l.b16 %v124
    %v390 = vunpack.c.h.b16 %v124
    %v391 = vunpack.c.l.b16 %v125
    %v392 = vunpack.c.h.b16 %v125
    %v393 = vunpack.c.l.b16 %v126
    %v394 = vunpack.c.h.b16 %v126
    %v395 = vunpack.c.l.b16 %v127
    %v396 = vunpack.c.h.b16 %v127
    %v397 = vunpack.c.l.b16 %v128
    %v398 = vunpack.c.h.b16 %v128
    %v399 = vunpack.c.l.b16 %v129
    %v400 = vunpack.c.h.b16 %v129
    %v401 = vunpack.c.l.b16 %v130
    %v402 = vunpack.c.h.b16 %v130
    %v403 = vunpack.c.l.b16 %v131
    %v404 = vunpack.c.h.b16 %v131
    %v405 = vunpack.c.l.b16 %v132
    %v406 = vunpack.c.h.b16 %v132
    %v407 = vunpack.c.l.b16 %v133
    %v408 = vunpack.c.h.b16 %v133
    %v409 = vunpack.c.l.b16 %v134
    %v410 = vunpack.c.h.b16 %v134
    %v411 = vunpack.c.l.b16 %v135
    %v412 = vunpack.c.h.b16 %v135
    %v413 = vunpack.c.l.b16 %v136
    %v414 = vunpack.c.h.b16 %v136
    %v415 = vunpack.c.l.b16 %v137
    %v416 = vunpack.c.h.b16 %v137
    %v417 = vunpack.c.l.b16 %v138
    %v418 = vunpack.c.h.b16 %v138
    %v419 = vunpack.c.l.b16 %v139
    %v420 = vunpack.c.h.b16 %v139
    %v421 = vunpack.c.l.b16 %v140
    %v422 = vunpack.c.h.b16 %v140
    %v423 = vunpack.c.l.b16 %v141
    %v424 = vunpack.c.h.b16 %v141
    %v425 = vunpack.c.l.b16 %v142
    %v426 = vunpack.c.h.b16 %v142
    %v427 = vunpack.c.l.b16 %v143
    %v428 = vunpack.c.h.b16 %v143
    %v429 = vunpack.c.l.b16 %v144
    %v430 = vunpack.c.h.b16 %v144
    %v431 = vunpack.c.l.b16 %v145
    %v432 = vunpack.c.h.b16 %v145
    %v433 = vunpack.c.l.b16 %v146
    %v434 = vunpack.c.h.b16 %v146
    %v435 = vunpack.c.l.b16 %v147
    %v436 = vunpack.c.h.b16 %v147
    %v437 = vunpack.c.l.b16 %v148
    %v438 = vunpack.c.h.b16 %v148
    %v439 = vunpack.c.l.b16 %v149
    %v440 = vunpack.c.h.b16 %v149
    %v441 = vunpack.c.l.b16 %v150
    %v442 = vunpack.c.h.b16 %v150
    %v443 = vunpack.c.l.b16 %v151
    %v444 = vunpack.c.h.b16 %v151
    %v445 = vunpack.c.l.b16 %v152
    %v446 = vunpack.c.h.b16 %v152
    %v447 = vunpack.c.l.b16 %v153
    %v448 = vunpack.c.h.b16 %v153
    %v449 = vunpack.c.l.b16 %v154
    %v450 = vunpack.c.h.b16 %v154
    %v451 = vunpack.c.l.b16 %v155
    %v452 = vunpack.c.h.b16 %v155
    %v453 = vunpack.c.l.b16 %v156
    %v454 = vunpack.c.h.b16 %v156
    %v455 = vunpack.c.l.b16 %v157
    %v456 = vunpack.c.h.b16 %v157
    %v457 = vunpack.c.l.b16 %v158
    %v458 = vunpack.c.h.b16 %v158
    %v459 = vunpack.c.l.b16 %v159
    %v460 = vunpack.c.h.b16 %v159
    %v461 = vunpack.c.l.b16 %v160
    %v462 = vunpack.c.h.b16 %v160
    %v463 = vunpack.c.l.b16 %v161
    %v464 = vunpack.c.h.b16 %v161
    %v465 = vunpack.c.l.b16 %v162
    %v466 = vunpack.c.h.b16 %v162
    %v467 = vunpack.c.l.b16 %v163
    %v468 = vunpack.c.h.b16 %v163
    %v469 = vunpack.c.l.b16 %v164
    %v470 = vunpack.c.h.b16 %v164
    %v471 = vunpack.c.l.b16 %v165
    %v472 = vunpack.c.h.b16 %v165
    %v473 = vunpack.c.l.b16 %v166
    %v474 = vunpack.c.h.b16 %v166
    %v475 = vunpack.c.l.b16 %v167
    %v476 = vunpack.c.h.b16 %v167
    %v477 = vunpack.c.l.b16 %v168
    %v478 = vunpack.c.h.b16 %v168
    %v479 = vunpack.c.l.b16 %v169
    %v480 = vunpack.c.h.b16 %v169
    %v481 = vunpack.c.l.b16 %v170
    %v482 = vunpack.c.h.b16 %v170
    %v483 = vunpack.c.l.b16 %v171
    %v484 = vunpack.c.h.b16 %v171
    %v485 = vunpack.c.l.b16 %v172
    %v486 = vunpack.c.h.b16 %v172
    %v487 = vunpack.c.l.b16 %v173
    %v488 = vunpack.c.h.b16 %v173
    %v489 = vunpack.c.l.b16 %v174
    %v490 = vunpack.c.h.b16 %v174
    %v491 = vunpack.c.l.b16 %v175
    %v492 = vunpack.c.h.b16 %v175
    %v493 = vunpack.c.l.b16 %v176
    %v494 = vunpack.c.h.b16 %v176
    %v495 = vunpack.c.l.b16 %v177
    %v496 = vunpack.c.h.b16 %v177
    %v497 = vunpack.c.l.b16 %v178
    %v498 = vunpack.c.h.b16 %v178
    %v499 = vunpack.c.l.b16 %v179
    %v500 = vunpack.c.h.b16 %v179
    %v501 = vunpack.c.l.b16 %v180
    %v502 = vunpack.c.h.b16 %v180
    %v503 = vunpack.c.l.b16 %v181
    %v504 = vunpack.c.h.b16 %v181
    %v505 = vunpack.c.l.b16 %v182
    %v506 = vunpack.c.h.b16 %v182
    %v507 = vunpack.c.l.b16 %v183
    %v508 = vunpack.c.h.b16 %v183
    %v509 = vunpack.c.l.b16 %v184
    %v510 = vunpack.c.h.b16 %v184
    %v511 = vunpack.c.l.b16 %v185
    %v512 = vunpack.c.h.b16 %v185
    %v513 = vunpack.c.l.b16 %v186
    %v514 = vunpack.c.h.b16 %v186
    %v515 = vunpack.c.l.b16 %v187
    %v516 = vunpack.c.h.b16 %v187
    %v517 = vunpack.c.l.b16 %v188
    %v518 = vunpack.c.h.b16 %v188
    %v519 = vunpack.c.l.b16 %v189
    %v520 = vunpack.c.h.b16 %v189
    %v521 = vunpack.c.l.b16 %v190
    %v522 = vunpack.c.h.b16 %v190
    %v523 = vunpack.c.l.b16 %v191
    %v524 = vunpack.c.h.b16 %v191
    %v525 = vunpack.c.l.b16 %v192
    %v526 = vunpack.c.h.b16 %v192
    %v527 = vunpack.c.l.b16 %v193
    %v528 = vunpack.c.h.b16 %v193
    %v529 = vunpack.c.l.b16 %v194
    %v530 = vunpack.c.h.b16 %v194
    %v531 = vunpack.c.l.b16 %v195
    %v532 = vunpack.c.h.b16 %v195
    %v533 = vunpack.c.l.b16 %v196
    %v534 = vunpack.c.h.b16 %v196
    %v535 = vunpack.c.l.b16 %v197
    %v536 = vunpack.c.h.b16 %v197
    %v537 = vunpack.c.l.b16 %v198
    %v538 = vunpack.c.h.b16 %v198
    %v539 = vunpack.c.l.b16 %v199
    %v540 = vunpack.c.h.b16 %v199
    %v541 = vunpack.c.l.b16 %v200
    %v542 = vunpack.c.h.b16 %v200
    %v543 = vunpack.c.l.b16 %v201
    %v544 = vunpack.c.h.b16 %v201
    %v545 = vunpack.c.l.b16 %v202
    %v546 = vunpack.c.h.b16 %v202
    %v547 = vunpack.c.l.b16 %v203
    %v548 = vunpack.c.h.b16 %v203
    %v549 = vunpack.c.l.b16 %v204
    %v550 = vunpack.c.h.b16 %v204
    %v551 = vunpack.c.l.b16 %v205
    %v552 = vunpack.c.h.b16 %v205
    %v553 = vunpack.c.l.b16 %v206
    %v554 = vunpack.c.h.b16 %v206
    %v555 = vpack.c.b16 %v333, %v331
    %v556 = vpack.c.b16 %v334, %v332
    %v557 = vpack.c.b16 %v337, %v335
    %v558 = vpack.c.b16 %v338, %v336
    %v559 = vpack.c.b16 %v341, %v339
    %v560 = vpack.c.b16 %v342, %v340
    %v561 = vpack.c.b16 %v345, %v343
    %v562 = vpack.c.b16 %v346, %v344
    %v563 = vpack.c.b16 %v349, %v347
    %v564 = vpack.c.b16 %v350, %v348
    %v565 = vpack.c.b16 %v353, %v351
    %v566 = vpack.c.b16 %v354, %v352
    %v567 = vpack.c.b16 %v357, %v355
    %v568 = vpack.c.b16 %v358, %v356
    %v569 = vpack.c.b16 %v361, %v359
    %v570 = vpack.c.b16 %v362, %v360
    %v571 = vpack.c.b16 %v365, %v363
    %v572 = vpack.c.b16 %v366, %v364
    %v573 = vpack.c.b16 %v369, %v367
    %v574 = vpack.c.b16 %v370, %v368
    %v575 = vpack.c.b16 %v373, %v371
    %v576 = vpack.c.b16 %v374, %v372
    %v577 = vpack.c.b16 %v377, %v375
    %v578 = vpack.c.b16 %v378, %v376
    %v579 = vpack.c.b16 %v381, %v379
    %v580 = vpack.c.b16 %v382, %v380
    %v581 = vpack.c.b16 %v385, %v383
    %v582 = vpack.c.b16 %v386, %v384
    %v583 = vpack.c.b16 %v389, %v387
    %v584 = vpack.c.b16 %v390, %v388
    %v585 = vpack.c.b16 %v393, %v391
    %v586 = vpack.c.b16 %v394, %v392
    %v587 = vpack.c.b16 %v397, %v395
    %v588 = vpack.c.b16 %v398, %v396
    %v589 = vpack.c.b16 %v401, %v399
    %v590 = vpack.c.b16 %v402, %v400
    %v591 = vpack.c.b16 %v405, %v403
    %v592 = vpack.c.b16 %v406, %v404
    %v593 = vpack.c.b16 %v409, %v407
    %v594 = vpack.c.b16 %v410, %v408
    %v595 = vpack.c.b16 %v413, %v411
    %v596 = vpack.c.b16 %v414, %v412
    %v597 = vpack.c.b16 %v417, %v415
    %v598 = vpack.c.b16 %v418, %v416
    %v599 = vpack.c.b16 %v421, %v419
    %v600 = vpack.c.b16 %v422, %v420
    %v601 = vpack.c.b16 %v425, %v423
    %v602 = vpack.c.b16 %v426, %v424
    %v603 = vpack.c.b16 %v429, %v427
    %v604 = vpack.c.b16 %v430, %v428
    %v605 = vpack.c.b16 %v433, %v431
    %v606 = vpack.c.b16 %v434, %v432
    %v607 = vpack.c.b16 %v437, %v435
    %v608 = vpack.c.b16 %v438, %v436
    %v609 = vpack.c.b16 %v441, %v439
    %v610 = vpack.c.b16 %v442, %v440
    %v611 = vpack.c.b16 %v445, %v443
    %v612 = vpack.c.b16 %v446, %v444
    %v613 = vpack.c.b16 %v449, %v447
    %v614 = vpack.c.b16 %v450, %v448
    %v615 = vpack.c.b16 %v453, %v451
    %v616 = vpack.c.b16 %v454, %v452
    %v617 = vpack.c.b16 %v457, %v455
    %v618 = vpack.c.b16 %v458, %v456
    %v619 = vpack.c.b16 %v461, %v459
    %v620 = vpack.c.b16 %v462, %v460
    %v621 = vpack.c.b16 %v465, %v463
    %v622 = vpack.c.b16 %v466, %v464
    %v623 = vpack.c.b16 %v469, %v467
    %v624 = vpack.c.b16 %v470, %v468
    %v625 = vpack.c.b16 %v473, %v471
    %v626 = vpack.c.b16 %v474, %v472
    %v627 = vpack.c.b16 %v477, %v475
    %v628 = vpack.c.b16 %v478, %v476
    %v629 = vpack.c.b16 %v481, %v479
    %v630 = vpack.c.b16 %v482, %v480
    %v631 = vpack.c.b16 %v485, %v483
    %v632 = vpack.c.b16 %v486, %v484
    %v633 = vpack.c.b16 %v489, %v487
    %v634 = vpack.c.b16 %v490, %v488
    %v635 = vpack.c.b16 %v493, %v491
    %v636 = vpack.c.b16 %v494, %v492
    %v637 = vpack.c.b16 %v497, %v495
    %v638 = vpack.c.b16 %v498, %v496
    %v639 = vpack.c.b16 %v501, %v499
    %v640 = vpack.c.b16 %v502, %v500
    %v641 = vpack.c.b16 %v505, %v503
    %v642 = vpack.c.b16 %v506, %v504
    %v643 = vpack.c.b16 %v509, %v507
    %v644 = vpack.c.b16 %v510, %v508
    %v645 = vpack.c.b16 %v513, %v511
    %v646 = vpack.c.b16 %v514, %v512
    %v647 = vpack.c.b16 %v517, %v515
    %v648 = vpack.c.b16 %v518, %v516
    %v649 = vpack.c.b16 %v521, %v519
    %v650 = vpack.c.b16 %v522, %v520
    %v651 = vpack.c.b16 %v525, %v523
    %v652 = vpack.c.b16 %v526, %v524
    %v653 = vpack.c.b16 %v529, %v527
    %v654 = vpack.c.b16 %v530, %v528
    %v655 = vpack.c.b16 %v533, %v531
    %v656 = vpack.c.b16 %v534, %v532
    %v657 = vpack.c.b16 %v537, %v535
    %v658 = vpack.c.b16 %v538, %v536
    %v659 = vpack.c.b16 %v541, %v539
    %v660 = vpack.c.b16 %v542, %v540
    %v661 = vpack.c.b16 %v545, %v543
    %v662 = vpack.c.b16 %v546, %v544
    %v663 = vpack.c.b16 %v549, %v547
    %v664 = vpack.c.b16 %v550, %v548
    %v665 = vpack.c.b16 %v553, %v551
    %v666 = vpack.c.b16 %v554, %v552
    %779 = vmatprep.subr.bf16.mxu0 %v570
    %780 = vmatpush1.bf16.msra.mxu0 %v569
    %781 = vmatprep.subr.bf16.mxu0 %v568
    %782 = vmatpush1.bf16.msra.mxu0 %v567
    %783 = vmatprep.subr.bf16.mxu0 %v566
    %784 = vmatpush1.bf16.msra.mxu0 %v565
    %785 = vmatprep.subr.bf16.mxu0 %v564
    %786 = vmatpush1.bf16.msra.mxu0 %v563
    %787 = vmatprep.subr.bf16.mxu0 %v562
    %788 = vmatpush1.bf16.msra.mxu0 %v561
    %789 = vmatprep.subr.bf16.mxu0 %v560
    %790 = vmatpush1.bf16.msra.mxu0 %v559
    %791 = vmatprep.subr.bf16.mxu0 %v558
    %792 = vmatpush1.bf16.msra.mxu0 %v557
    %793 = vmatprep.subr.bf16.mxu0 %v556
    %794 = vmatpush1.bf16.msra.mxu0 %v555
    %795 = vmatprep.subr.bf16.mxu0 %v586
    %796 = vmatpush2.bf16.msra.mxu0 %v585
    %797 = vmatprep.subr.bf16.mxu0 %v584
    %798 = vmatpush2.bf16.msra.mxu0 %v583
    %799 = vmatprep.subr.bf16.mxu0 %v582
    %800 = vmatpush2.bf16.msra.mxu0 %v581
    %801 = vmatprep.subr.bf16.mxu0 %v580
    %802 = vmatpush2.bf16.msra.mxu0 %v579
    %803 = vmatprep.subr.bf16.mxu0 %v578
    %804 = vmatpush2.bf16.msra.mxu0 %v577
    %805 = vmatprep.subr.bf16.mxu0 %v576
    %806 = vmatpush2.bf16.msra.mxu0 %v575
    %807 = vmatprep.subr.bf16.mxu0 %v574
    %808 = vmatpush2.bf16.msra.mxu0 %v573
    %809 = vmatprep.subr.bf16.mxu0 %v572
    %810 = vmatpush2.bf16.msra.mxu0 %v571
    %811 = vmatprep.mubr.bf16.mxu0 %v89
    %812 = vmatmul.mubr.bf16.gmra.mxu0 %v88
    %v813 = vpop.f32.mrf.mxu0
    %v814 = vadd.f32 %v212, %v813
    %v815 = vpop.f32.mrf.mxu0
    %v816 = vadd.f32 %v216, %v815
    %v817 = vpop.f32.mrf.mxu0
    %v818 = vpop.f32.mrf.mxu0
    %819 = vdwg.mxu0
    %820 = vmatprep.subr.bf16.mxu0 %v602
    %821 = vmatpush1.bf16.msra.mxu0 %v601
    %822 = vmatprep.subr.bf16.mxu0 %v600
    %823 = vmatpush1.bf16.msra.mxu0 %v599
    %824 = vmatprep.subr.bf16.mxu0 %v598
    %825 = vmatpush1.bf16.msra.mxu0 %v597
    %826 = vmatprep.subr.bf16.mxu0 %v596
    %827 = vmatpush1.bf16.msra.mxu0 %v595
    %828 = vmatprep.subr.bf16.mxu0 %v594
    %829 = vmatpush1.bf16.msra.mxu0 %v593
    %830 = vmatprep.subr.bf16.mxu0 %v592
    %831 = vmatpush1.bf16.msra.mxu0 %v591
    %832 = vmatprep.subr.bf16.mxu0 %v590
    %833 = vmatpush1.bf16.msra.mxu0 %v589
    %834 = vmatprep.subr.bf16.mxu0 %v588
    %835 = vmatpush1.bf16.msra.mxu0 %v587
    %836 = vmatprep.subr.bf16.mxu0 %v618
    %837 = vmatpush2.bf16.msra.mxu0 %v617
    %838 = vmatprep.subr.bf16.mxu0 %v616
    %839 = vmatpush2.bf16.msra.mxu0 %v615
    %840 = vmatprep.subr.bf16.mxu0 %v614
    %841 = vmatpush2.bf16.msra.mxu0 %v613
    %842 = vmatprep.subr.bf16.mxu0 %v612
    %843 = vmatpush2.bf16.msra.mxu0 %v611
    %844 = vmatprep.subr.bf16.mxu0 %v610
    %845 = vmatpush2.bf16.msra.mxu0 %v609
    %846 = vmatprep.subr.bf16.mxu0 %v608
    %847 = vmatpush2.bf16.msra.mxu0 %v607
    %848 = vmatprep.subr.bf16.mxu0 %v606
    %849 = vmatpush2.bf16.msra.mxu0 %v605
    %850 = vmatprep.subr.bf16.mxu0 %v604
    %851 = vmatpush2.bf16.msra.mxu0 %v603
    %852 = vmatprep.mubr.bf16.mxu0 %v91
    %853 = vmatmul.mubr.bf16.gmra.mxu0 %v90
    %v854 = vpop.f32.mrf.mxu0
    %v855 = vadd.f32 %v814, %v854
    %v856 = vpop.f32.mrf.mxu0
    %v857 = vadd.f32 %v816, %v856
    %v858 = vpop.f32.mrf.mxu0
    %v859 = vpop.f32.mrf.mxu0
    %860 = vdwg.mxu0
    %861 = vmatprep.subr.bf16.mxu0 %v634
    %862 = vmatpush1.bf16.msra.mxu0 %v633
    %863 = vmatprep.subr.bf16.mxu0 %v632
    %864 = vmatpush1.bf16.msra.mxu0 %v631
    %865 = vmatprep.subr.bf16.mxu0 %v630
    %866 = vmatpush1.bf16.msra.mxu0 %v629
    %867 = vmatprep.subr.bf16.mxu0 %v628
    %868 = vmatpush1.bf16.msra.mxu0 %v627
    %869 = vmatprep.subr.bf16.mxu0 %v626
    %870 = vmatpush1.bf16.msra.mxu0 %v625
    %871 = vmatprep.subr.bf16.mxu0 %v624
    %872 = vmatpush1.bf16.msra.mxu0 %v623
    %873 = vmatprep.subr.bf16.mxu0 %v622
    %874 = vmatpush1.bf16.msra.mxu0 %v621
    %875 = vmatprep.subr.bf16.mxu0 %v620
    %876 = vmatpush1.bf16.msra.mxu0 %v619
    %877 = vmatprep.subr.bf16.mxu0 %v650
    %878 = vmatpush2.bf16.msra.mxu0 %v649
    %879 = vmatprep.subr.bf16.mxu0 %v648
    %880 = vmatpush2.bf16.msra.mxu0 %v647
    %881 = vmatprep.subr.bf16.mxu0 %v646
    %882 = vmatpush2.bf16.msra.mxu0 %v645
    %883 = vmatprep.subr.bf16.mxu0 %v644
    %884 = vmatpush2.bf16.msra.mxu0 %v643
    %885 = vmatprep.subr.bf16.mxu0 %v642
    %886 = vmatpush2.bf16.msra.mxu0 %v641
    %887 = vmatprep.subr.bf16.mxu0 %v640
    %888 = vmatpush2.bf16.msra.mxu0 %v639
    %889 = vmatprep.subr.bf16.mxu0 %v638
    %890 = vmatpush2.bf16.msra.mxu0 %v637
    %891 = vmatprep.subr.bf16.mxu0 %v636
    %892 = vmatpush2.bf16.msra.mxu0 %v635
    %893 = vmatprep.mubr.bf16.mxu0 %v93
    %894 = vmatmul.mubr.bf16.gmra.mxu0 %v92
    %v895 = vpop.f32.mrf.mxu0
    %v896 = vadd.f32 %v855, %v895
    %v897 = vpop.f32.mrf.mxu0
    %v898 = vadd.f32 %v857, %v897
    %v899 = vpop.f32.mrf.mxu0
    %v900 = vpop.f32.mrf.mxu0
    %901 = vdwg.mxu0
    %902 = vmatprep.subr.bf16.mxu0 %v666
    %903 = vmatpush1.bf16.msra.mxu0 %v665
    %904 = vmatprep.subr.bf16.mxu0 %v664
    %905 = vmatpush1.bf16.msra.mxu0 %v663
    %906 = vmatprep.subr.bf16.mxu0 %v662
    %907 = vmatpush1.bf16.msra.mxu0 %v661
    %908 = vmatprep.subr.bf16.mxu0 %v660
    %909 = vmatpush1.bf16.msra.mxu0 %v659
    %910 = vmatprep.subr.bf16.mxu0 %v658
    %911 = vmatpush1.bf16.msra.mxu0 %v657
    %912 = vmatprep.subr.bf16.mxu0 %v656
    %913 = vmatpush1.bf16.msra.mxu0 %v655
    %914 = vmatprep.subr.bf16.mxu0 %v654
    %915 = vmatpush1.bf16.msra.mxu0 %v653
    %916 = vmatprep.subr.bf16.mxu0 %v652
    %917 = vmatpush1.bf16.msra.mxu0 %v651
    %918 = vmatprep.subr.bf16.mxu0 0
    %919 = vmatpush2.bf16.msra.mxu0 0
    %920 = vmatprep.subr.bf16.mxu0 0
    %921 = vmatpush2.bf16.msra.mxu0 0
    %922 = vmatprep.subr.bf16.mxu0 0
    %923 = vmatpush2.bf16.msra.mxu0 0
    %924 = vmatprep.subr.bf16.mxu0 0
    %925 = vmatpush2.bf16.msra.mxu0 0
    %926 = vmatprep.subr.bf16.mxu0 0
    %927 = vmatpush2.bf16.msra.mxu0 0
    %928 = vmatprep.subr.bf16.mxu0 0
    %929 = vmatpush2.bf16.msra.mxu0 0
    %930 = vmatprep.subr.bf16.mxu0 0
    %931 = vmatpush2.bf16.msra.mxu0 0
    %932 = vmatprep.subr.bf16.mxu0 0
    %933 = vmatpush2.bf16.msra.mxu0 0
    %934 = vmatprep.mubr.bf16.mxu0 0
    %935 = vmatmul.mubr.bf16.gmra.mxu0 %v94
    %v936 = vpop.f32.mrf.mxu0
    %v937 = vadd.f32 %v896, %v936
    %v938 = vpop.f32.mrf.mxu0
    %v939 = vadd.f32 %v898, %v938
    %v940 = vpop.f32.mrf.mxu0
    %v941 = vpop.f32.mrf.mxu0
    %942 = vdwg.mxu0
    %v943 = vmax.f32 %v937, 0.0
    %v944 = vmax.f32 %v939, 0.0
    %v945 = vpack.c.bf16 %v943, %v943
    %v946 = vpack.c.bf16 %v944, %v944
    %v947 = vld [vmem:[#allocation7] sm:$0xf]
    %v948 = vld [vmem:[#allocation7 + $0x4] sm:$0xf]
    %v949 = vld [vmem:[#allocation7 + $0x8] sm:$0xf]
    %v950 = vld [vmem:[#allocation7 + $0xc] sm:$0xf]
    %v951 = vld [vmem:[#allocation7 + $0x10] sm:$0xf]
    %v952 = vld [vmem:[#allocation7 + $0x14] sm:$0xf]
    %v953 = vld [vmem:[#allocation7 + $0x18] sm:$0xf]
    %v954 = vld [vmem:[#allocation7 + $0x1c] sm:$0xf]
    %v955 = vld [vmem:[#allocation7 + $0x20] sm:$0xf]
    %v956 = vld [vmem:[#allocation7 + $0x24] sm:$0xf]
    %v957 = vld [vmem:[#allocation7 + $0x28] sm:$0xf]
    %v958 = vld [vmem:[#allocation7 + $0x2c] sm:$0xf]
    %v959 = vld [vmem:[#allocation7 + $0x30] sm:$0xf]
    %v960 = vld [vmem:[#allocation7 + $0x34] sm:$0xf]
    %v961 = vld [vmem:[#allocation7 + $0x38] sm:$0xf]
    %v962 = vld [vmem:[#allocation7 + $0x3c] sm:$0xf]
    %v963 = vld [vmem:[#allocation7 + $0x40] sm:$0xf]
    %v964 = vld [vmem:[#allocation7 + $0x44] sm:$0xf]
    %v965 = vld [vmem:[#allocation7 + $0x48] sm:$0xf]
    %v966 = vld [vmem:[#allocation7 + $0x4c] sm:$0xf]
    %v967 = vld [vmem:[#allocation7 + $0x50] sm:$0xf]
    %v968 = vld [vmem:[#allocation7 + $0x54] sm:$0xf]
    %v969 = vld [vmem:[#allocation7 + $0x58] sm:$0xf]
    %v970 = vld [vmem:[#allocation7 + $0x5c] sm:$0xf]
    %v971 = vld [vmem:[#allocation7 + $0x60] sm:$0xf]
    %v972 = vld [vmem:[#allocation7 + $0x64] sm:$0xf]
    %v973 = vld [vmem:[#allocation7 + $0x68] sm:$0xf]
    %v974 = vld [vmem:[#allocation7 + $0x6c] sm:$0xf]
    %v975 = vld [vmem:[#allocation7 + $0x70] sm:$0xf]
    %v976 = vld [vmem:[#allocation7 + $0x74] sm:$0xf]
    %v977 = vld [vmem:[#allocation7 + $0x78] sm:$0xf]
    %v978 = vld [vmem:[#allocation7 + $0x7c] sm:$0xf]
    %v979 = vld [vmem:[%s4] sm:$0x1]
    %v981 = vlaneseq
    %v982 = vshrl.u32 %v981, 7
    %v983 = vsub.s32 0, %v982
    %v984 = vrot.slane %v979, %v983
    %v1018 = vunpack.c.l.b16 %v947
    %v1019 = vunpack.c.l.b16 %v948
    %v1020 = vunpack.c.l.b16 %v949
    %v1021 = vunpack.c.l.b16 %v950
    %v1022 = vunpack.c.l.b16 %v951
    %v1023 = vunpack.c.l.b16 %v952
    %v1024 = vunpack.c.l.b16 %v953
    %v1025 = vunpack.c.l.b16 %v954
    %v1026 = vunpack.c.l.b16 %v955
    %v1027 = vunpack.c.l.b16 %v956
    %v1028 = vunpack.c.l.b16 %v957
    %v1029 = vunpack.c.l.b16 %v958
    %v1030 = vunpack.c.l.b16 %v959
    %v1031 = vunpack.c.l.b16 %v960
    %v1032 = vunpack.c.l.b16 %v961
    %v1033 = vunpack.c.l.b16 %v962
    %v1034 = vunpack.c.l.b16 %v963
    %v1035 = vunpack.c.l.b16 %v964
    %v1036 = vunpack.c.l.b16 %v965
    %v1037 = vunpack.c.l.b16 %v966
    %v1038 = vunpack.c.l.b16 %v967
    %v1039 = vunpack.c.l.b16 %v968
    %v1040 = vunpack.c.l.b16 %v969
    %v1041 = vunpack.c.l.b16 %v970
    %v1042 = vunpack.c.l.b16 %v971
    %v1043 = vunpack.c.l.b16 %v972
    %v1044 = vunpack.c.l.b16 %v973
    %v1045 = vunpack.c.l.b16 %v974
    %v1046 = vunpack.c.l.b16 %v975
    %v1047 = vunpack.c.l.b16 %v976
    %v1048 = vunpack.c.l.b16 %v977
    %v1049 = vunpack.c.l.b16 %v978
    %v1050 = vpack.c.b16 %v1019, %v1018
    %v1051 = vpack.c.b16 %v1021, %v1020
    %v1052 = vpack.c.b16 %v1023, %v1022
    %v1053 = vpack.c.b16 %v1025, %v1024
    %v1054 = vpack.c.b16 %v1027, %v1026
    %v1055 = vpack.c.b16 %v1029, %v1028
    %v1056 = vpack.c.b16 %v1031, %v1030
    %v1057 = vpack.c.b16 %v1033, %v1032
    %v1058 = vpack.c.b16 %v1035, %v1034
    %v1059 = vpack.c.b16 %v1037, %v1036
    %v1060 = vpack.c.b16 %v1039, %v1038
    %v1061 = vpack.c.b16 %v1041, %v1040
    %v1062 = vpack.c.b16 %v1043, %v1042
    %v1063 = vpack.c.b16 %v1045, %v1044
    %v1064 = vpack.c.b16 %v1047, %v1046
    %v1065 = vpack.c.b16 %v1049, %v1048
    %1082 = vmatprep.subr.bf16.mxu0 0
    %1083 = vmatpush1.bf16.msra.mxu0 %v1057
    %1084 = vmatprep.subr.bf16.mxu0 0
    %1085 = vmatpush1.bf16.msra.mxu0 %v1056
    %1086 = vmatprep.subr.bf16.mxu0 0
    %1087 = vmatpush1.bf16.msra.mxu0 %v1055
    %1088 = vmatprep.subr.bf16.mxu0 0
    %1089 = vmatpush1.bf16.msra.mxu0 %v1054
    %1090 = vmatprep.subr.bf16.mxu0 0
    %1091 = vmatpush1.bf16.msra.mxu0 %v1053
    %1092 = vmatprep.subr.bf16.mxu0 0
    %1093 = vmatpush1.bf16.msra.mxu0 %v1052
    %1094 = vmatprep.subr.bf16.mxu0 0
    %1095 = vmatpush1.bf16.msra.mxu0 %v1051
    %1096 = vmatprep.subr.bf16.mxu0 0
    %1097 = vmatpush1.bf16.msra.mxu0 %v1050
    %1098 = vmatprep.subr.bf16.mxu0 0
    %1099 = vmatpush2.bf16.msra.mxu0 %v1065
    %1100 = vmatprep.subr.bf16.mxu0 0
    %1101 = vmatpush2.bf16.msra.mxu0 %v1064
    %1102 = vmatprep.subr.bf16.mxu0 0
    %1103 = vmatpush2.bf16.msra.mxu0 %v1063
    %1104 = vmatprep.subr.bf16.mxu0 0
    %1105 = vmatpush2.bf16.msra.mxu0 %v1062
    %1106 = vmatprep.subr.bf16.mxu0 0
    %1107 = vmatpush2.bf16.msra.mxu0 %v1061
    %1108 = vmatprep.subr.bf16.mxu0 0
    %1109 = vmatpush2.bf16.msra.mxu0 %v1060
    %1110 = vmatprep.subr.bf16.mxu0 0
    %1111 = vmatpush2.bf16.msra.mxu0 %v1059
    %1112 = vmatprep.subr.bf16.mxu0 0
    %1113 = vmatpush2.bf16.msra.mxu0 %v1058
    %1114 = vmatprep.mubr.bf16.mxu0 %v946
    %1115 = vmatmul.mubr.bf16.gmra.mxu0 %v945
    %v1116 = vpop.f32.mrf.mxu0
    %v1117 = vadd.f32 %v984, %v1116
    %v1118 = vpop.f32.mrf.mxu0
    %v1119 = vpop.f32.mrf.mxu0
    %v1120 = vpop.f32.mrf.mxu0
    %1121 = vdwg.mxu0
    %v1122 = vmax.f32 %v1117, 0.0
    %v1123 = vpack.c.bf16 %v1122, %v1122
    %v1124 = vld [vmem:[#allocation8] sm:$0xf]
    %v1125 = vld [vmem:[#allocation8 + $0x4] sm:$0xf]
    %v1126 = vld [vmem:[#allocation8 + $0x8] sm:$0xf]
    %v1127 = vld [vmem:[#allocation8 + $0xc] sm:$0xf]
    %v1128 = vld [vmem:[#allocation8 + $0x10] sm:$0xf]
    %v1129 = vld [vmem:[#allocation8 + $0x14] sm:$0xf]
    %v1130 = vld [vmem:[#allocation8 + $0x18] sm:$0xf]
    %v1131 = vld [vmem:[#allocation8 + $0x1c] sm:$0xf]
    %v1132 = vld [vmem:[#allocation8 + $0x20] sm:$0xf]
    %v1133 = vld [vmem:[#allocation8 + $0x24] sm:$0xf]
    %v1134 = vld [vmem:[#allocation8 + $0x28] sm:$0xf]
    %v1135 = vld [vmem:[#allocation8 + $0x2c] sm:$0xf]
    %v1136 = vld [vmem:[#allocation8 + $0x30] sm:$0xf]
    %v1137 = vld [vmem:[#allocation8 + $0x34] sm:$0xf]
    %v1138 = vld [vmem:[#allocation8 + $0x38] sm:$0xf]
    %v1139 = vld [vmem:[#allocation8 + $0x3c] sm:$0xf]
    %v1140 = vld [vmem:[%s6] sm:$0x1]
    %v1142 = vlaneseq
    %v1143 = vshrl.u32 %v1142, 7
    %v1144 = vsub.s32 0, %v1143
    %v1145 = vrot.slane %v1140, %v1144
    %v1163 = vunpack.c.l.b16 %v1124
    %v1164 = vunpack.c.l.b16 %v1125
    %v1165 = vunpack.c.l.b16 %v1126
    %v1166 = vunpack.c.l.b16 %v1127
    %v1167 = vunpack.c.l.b16 %v1128
    %v1168 = vunpack.c.l.b16 %v1129
    %v1169 = vunpack.c.l.b16 %v1130
    %v1170 = vunpack.c.l.b16 %v1131
    %v1171 = vunpack.c.l.b16 %v1132
    %v1172 = vunpack.c.l.b16 %v1133
    %v1173 = vunpack.c.l.b16 %v1134
    %v1174 = vunpack.c.l.b16 %v1135
    %v1175 = vunpack.c.l.b16 %v1136
    %v1176 = vunpack.c.l.b16 %v1137
    %v1177 = vunpack.c.l.b16 %v1138
    %v1178 = vunpack.c.l.b16 %v1139
    %v1179 = vpack.c.b16 %v1164, %v1163
    %v1180 = vpack.c.b16 %v1166, %v1165
    %v1181 = vpack.c.b16 %v1168, %v1167
    %v1182 = vpack.c.b16 %v1170, %v1169
    %v1183 = vpack.c.b16 %v1172, %v1171
    %v1184 = vpack.c.b16 %v1174, %v1173
    %v1185 = vpack.c.b16 %v1176, %v1175
    %v1186 = vpack.c.b16 %v1178, %v1177
    %1195 = vmatprep.subr.bf16.mxu0 0
    %1196 = vmatpush1.bf16.msra.mxu0 %v1186
    %1197 = vmatprep.subr.bf16.mxu0 0
    %1198 = vmatpush1.bf16.msra.mxu0 %v1185
    %1199 = vmatprep.subr.bf16.mxu0 0
    %1200 = vmatpush1.bf16.msra.mxu0 %v1184
    %1201 = vmatprep.subr.bf16.mxu0 0
    %1202 = vmatpush1.bf16.msra.mxu0 %v1183
    %1203 = vmatprep.subr.bf16.mxu0 0
    %1204 = vmatpush1.bf16.msra.mxu0 %v1182
    %1205 = vmatprep.subr.bf16.mxu0 0
    %1206 = vmatpush1.bf16.msra.mxu0 %v1181
    %1207 = vmatprep.subr.bf16.mxu0 0
    %1208 = vmatpush1.bf16.msra.mxu0 %v1180
    %1209 = vmatprep.subr.bf16.mxu0 0
    %1210 = vmatpush1.bf16.msra.mxu0 %v1179
    %1211 = vmatprep.subr.bf16.mxu0 0
    %1212 = vmatpush2.bf16.msra.mxu0 0
    %1213 = vmatprep.subr.bf16.mxu0 0
    %1214 = vmatpush2.bf16.msra.mxu0 0
    %1215 = vmatprep.subr.bf16.mxu0 0
    %1216 = vmatpush2.bf16.msra.mxu0 0
    %1217 = vmatprep.subr.bf16.mxu0 0
    %1218 = vmatpush2.bf16.msra.mxu0 0
    %1219 = vmatprep.subr.bf16.mxu0 0
    %1220 = vmatpush2.bf16.msra.mxu0 0
    %1221 = vmatprep.subr.bf16.mxu0 0
    %1222 = vmatpush2.bf16.msra.mxu0 0
    %1223 = vmatprep.subr.bf16.mxu0 0
    %1224 = vmatpush2.bf16.msra.mxu0 0
    %1225 = vmatprep.subr.bf16.mxu0 0
    %1226 = vmatpush2.bf16.msra.mxu0 0
    %1227 = vmatprep.mubr.bf16.mxu0 0
    %1228 = vmatmul.mubr.bf16.gmra.mxu0 %v1123
    %v1229 = vpop.f32.mrf.mxu0
    %v1230 = vadd.f32 %v1145, %v1229
    %v1231 = vpop.f32.mrf.mxu0
    %v1232 = vpop.f32.mrf.mxu0
    %v1233 = vpop.f32.mrf.mxu0
    %1234 = vdwg.mxu0
    %1235 = vst [vmem:[#allocation10] sm:$0xff] %v1230
    // Predicated region
    $region46: #{tpu_custom_call.1} parent=1 // pred_check
      _
    $region47: #{tpu_custom_call.1} parent=1 // pred_check_branch
      %1237 = sbr.rel (0) target = $region49
    $region48: #{tpu_custom_call.1} parent=1 // pred_region
      %s1239 = ssub.s32 128, 128
      %1240 = vsyncadd [#allocation4], %s1239
      %s1242 = sshll.u32 [#allocation10], 4
      %s1243 = int_to_ptr.vmem [resolvable:$true] %s1242
      %1245 = dma.vmem_to_hbm [thread:$0]  %s1243, 128, %s7, [#allocation4]
    $region49: #{tpu_custom_call.1} parent=1 // pred_fallthru
      _
    // Predicated region
    $region50: #{tpu_custom_call.1} parent=1 // pred_check
      _
    $region51: #{tpu_custom_call.1} parent=1 // pred_check_branch
      %1247 = sbr.rel (0) target = $region53
    $region52: #{tpu_custom_call.1} parent=1 // pred_region
      %1248 = dma.done [#allocation4], 128
    $region53: #{tpu_custom_call.1} parent=1 // pred_fallthru
      _
    %1249 = vsyncpa [#allocation3], 1
    %1250 = vsyncpa [#allocation6], 1
    %1251 = vsyncpa [#allocation9], 1
    %1252 = vsyncpa [#allocation4], 1

</llo_original>
